<compile_context>
chip_gen: v7x
topology: tpu7x:2x2x1
jax: 0.10.0
libtpu: 0.0.40
codegen_flags: <defaults>
</compile_context>

<pallas_src>
import jax
import jax.numpy as jnp
from jax.experimental import pallas as pl
from jax.experimental.pallas import tpu as pltpu


def _round_up(x, m):
    return ((x + m - 1) // m) * m


def _make_conv_kernel(apply_relu: bool, apply_bn: bool):
    """Fused conv-as-matmul kernel: out = [bn](relu(patches @ W + b))."""

    def kernel(*refs):
        if apply_bn:
            p_ref, w_ref, b_ref, scale_ref, shift_ref, o_ref = refs
        else:
            p_ref, w_ref, b_ref, o_ref = refs
        # MXU matmul: (tm, Kp) @ (Kp, Np) -> (tm, Np), f32 accumulation.
        acc = jnp.dot(p_ref[...], w_ref[...], preferred_element_type=jnp.float32)
        acc = acc + b_ref[...]              # bias: (1, Np) broadcast, VPU (free under MXU)
        if apply_relu:
            acc = jnp.maximum(acc, 0.0)     # ReLU (module default relu=True)
        if apply_bn:
            # Inference BatchNorm folded to per-channel affine; applied AFTER
            # ReLU, matching the module's forward order (conv -> relu -> bn).
            acc = acc * scale_ref[...] + shift_ref[...]
        o_ref[...] = acc.astype(o_ref.dtype)

    return kernel


def conv_forward(x, weight, bias, *, stride=1, relu=True, bn_params=None,
                 tile_m=256):
    """Conv.forward: x (N,Cin,H,W) NCHW, weight (Cout,Cin,K,K), bias (Cout,)."""
    N, Cin, H, W = x.shape
    Cout, Cin_w, K, K2 = weight.shape
    assert Cin == Cin_w, "{}{}".format(Cin, Cin_w)   # mirrors the torch assert
    assert K == K2
    pad = (K - 1) // 2
    Hout = (H + 2 * pad - K) // stride + 1
    Wout = (W + 2 * pad - K) // stride + 1

    # ---- layout plumbing (zero FLOPs): NHWC, zero pad, im2col --------------
    x_nhwc = jnp.transpose(x, (0, 2, 3, 1)).astype(jnp.float32)
    xp = jnp.pad(x_nhwc, ((0, 0), (pad, pad), (pad, pad), (0, 0)))
    cols = []
    for kh in range(K):
        for kw in range(K):
            cols.append(xp[:, kh:kh + stride * Hout:stride,
                           kw:kw + stride * Wout:stride, :])   # (N,Hout,Wout,Cin)
    # patch element order = (kh, kw, cin)
    patches = jnp.concatenate(cols, axis=-1).reshape(N * Hout * Wout, K * K * Cin)
    # weight (Cout,Cin,Kh,Kw) -> (Kh,Kw,Cin,Cout) -> (K*K*Cin, Cout)
    w_mat = jnp.transpose(weight, (2, 3, 1, 0)).reshape(K * K * Cin, Cout)
    w_mat = w_mat.astype(jnp.float32)

    # ---- pad to MXU / vreg friendly sizes (lane-dense in and out) ----------
    M, Kdim = patches.shape
    Kp = _round_up(Kdim, 128)
    Np = _round_up(Cout, 128)
    tm = min(tile_m, _round_up(M, 8))        # multiple of 8 (sublane)
    Mp = _round_up(M, tm)

    patches_p = jnp.pad(patches, ((0, Mp - M), (0, Kp - Kdim)))
    w_p = jnp.pad(w_mat, ((0, Kp - Kdim), (0, Np - Cout)))
    b_p = jnp.pad(bias.astype(jnp.float32), (0, Np - Cout)).reshape(1, Np)

    apply_bn = bn_params is not None
    inputs = [patches_p, w_p, b_p]
    in_specs = [
        pl.BlockSpec((tm, Kp), lambda i: (i, 0)),     # streamed over M
        pl.BlockSpec((Kp, Np), lambda i: (0, 0)),     # grid-invariant (resident)
        pl.BlockSpec((1, Np), lambda i: (0, 0)),      # grid-invariant
    ]
    if apply_bn:
        gamma, beta, mean, var, eps = bn_params
        scale = gamma.astype(jnp.float32) / jnp.sqrt(var.astype(jnp.float32) + eps)
        shift = beta.astype(jnp.float32) - mean.astype(jnp.float32) * scale
        inputs += [jnp.pad(scale, (0, Np - Cout)).reshape(1, Np),
                   jnp.pad(shift, (0, Np - Cout)).reshape(1, Np)]
        in_specs += [pl.BlockSpec((1, Np), lambda i: (0, 0)),
                     pl.BlockSpec((1, Np), lambda i: (0, 0))]

    bytes_accessed = (patches_p.size + w_p.size + Mp * Np) * 4
    out = pl.pallas_call(
        _make_conv_kernel(relu, apply_bn),
        out_shape=jax.ShapeDtypeStruct((Mp, Np), jnp.float32),
        grid=(Mp // tm,),
        in_specs=in_specs,
        out_specs=pl.BlockSpec((tm, Np), lambda i: (i, 0)),
        compiler_params=pltpu.CompilerParams(
            dimension_semantics=("parallel",),       # megacore-shard the M tiles
        ),
        cost_estimate=pl.CostEstimate(
            flops=2 * Mp * Kp * Np, transcendentals=0,
            bytes_accessed=bytes_accessed),
    )(*inputs)

    # Strip padding, back to NCHW.
    out = out[:M, :Cout].reshape(N, Hout, Wout, Cout)
    return jnp.transpose(out, (0, 3, 1, 2)).astype(x.dtype)


if __name__ == "__main__":
    key = jax.random.PRNGKey(0)
    kx, kw, kb = jax.random.split(key, 3)

    # Small shapes consistent with the module: batch=2, in_ch=4, 16x16 spatial,
    # out_ch=64, kernel_size=7, stride=1, bn=False, relu=True (module defaults).
    N, Cin, H, W = 2, 4, 16, 16
    Cout, K = 64, 7
    x = jax.random.normal(kx, (N, Cin, H, W), jnp.float32)
    w = 0.05 * jax.random.normal(kw, (Cout, Cin, K, K), jnp.float32)
    b = 0.1 * jax.random.normal(kb, (Cout,), jnp.float32)

    y = conv_forward(x, w, b, stride=1, relu=True, bn_params=None)
    jax.block_until_ready(y)

    # Reference semantics: Conv2d(pad=(K-1)//2, stride=1) -> ReLU.
    pad = (K - 1) // 2
    ref = jax.lax.conv_general_dilated(
        x, w, window_strides=(1, 1), padding=[(pad, pad), (pad, pad)],
        dimension_numbers=("NCHW", "OIHW", "NCHW"),
        precision=jax.lax.Precision.HIGHEST,
    ) + b[None, :, None, None]
    ref = jnp.maximum(ref, 0.0)

    assert y.shape == ref.shape and y.dtype == ref.dtype
    # Loose tolerance: the kernel's MXU matmul uses default (bf16-pass) f32
    # precision while the reference uses HIGHEST.
    assert bool(jnp.allclose(y, ref, atol=2e-2, rtol=2e-2)), \
        float(jnp.max(jnp.abs(y - ref)))

    print("KERNEL_OK")
</pallas_src>

<mosaic_0001>
module attributes {stable_mosaic.version = 11 : i64} {
  func.func @kernel(%arg0: i32, %arg1: memref<256x256xf32, #tpu.memory_space<vmem>>, %arg2: memref<256x128xf32, #tpu.memory_space<vmem>>, %arg3: memref<1x128xf32, #tpu.memory_space<vmem>>, %arg4: memref<256x128xf32, #tpu.memory_space<vmem>>) attributes {dimension_semantics = [#tpu.dimension_semantics<parallel>], iteration_bounds = array<i64: 2>, scalar_prefetch = 0 : i64, scratch_operands = 0 : i64, tpu.core_type = #tpu.core_type<tc>, window_params = [{transform_indices = @transform_0, window_bounds = array<i64: 256, 256>}, {pipeline_mode = #tpu.pipeline_mode<synchronous>, transform_indices = @transform_1, window_bounds = array<i64: 256, 128>}, {pipeline_mode = #tpu.pipeline_mode<synchronous>, transform_indices = @transform_2, window_bounds = array<i64: 1, 128>}, {transform_indices = @transform_3, window_bounds = array<i64: 256, 128>}]} {
    %c0 = arith.constant 0 : index
    %c0_0 = arith.constant 0 : index
    %0 = vector.load %arg1[%c0, %c0_0] : memref<256x256xf32, #tpu.memory_space<vmem>>, vector<256x256xf32>
    %c0_1 = arith.constant 0 : index
    %c0_2 = arith.constant 0 : index
    %1 = vector.load %arg2[%c0_1, %c0_2] : memref<256x128xf32, #tpu.memory_space<vmem>>, vector<256x128xf32>
    %cst = arith.constant dense<0.000000e+00> : vector<256x128xf32>
    %2 = tpu.matmul %0, %1, %cst {dimension_numbers = #tpu.dot_dimension_numbers<[1], [0], [0], [1], [0, 0, 1, 1], [], []>} : vector<256x256xf32>, vector<256x128xf32>, vector<256x128xf32> -> vector<256x128xf32>
    %c0_3 = arith.constant 0 : index
    %c0_4 = arith.constant 0 : index
    %3 = vector.load %arg3[%c0_3, %c0_4] : memref<1x128xf32, #tpu.memory_space<vmem>>, vector<1x128xf32>
    %4 = vector.broadcast %3 : vector<1x128xf32> to vector<256x128xf32>
    %5 = arith.addf %2, %4 : vector<256x128xf32>
    %cst_5 = arith.constant 0.000000e+00 : f32
    %6 = vector.broadcast %cst_5 : f32 to vector<256x128xf32>
    %7 = arith.maximumf %5, %6 : vector<256x128xf32>
    %c0_6 = arith.constant 0 : index
    %c0_7 = arith.constant 0 : index
    %8 = vector.load %arg4[%c0_6, %c0_7] : memref<256x128xf32, #tpu.memory_space<vmem>>, vector<256x128xf32>
    tpu.vector_store %arg4[%c0_6, %c0_7], %7 {strides = array<i32>} : memref<256x128xf32, #tpu.memory_space<vmem>>, vector<256x128xf32>,
    return
  }
  func.func @transform_0(%arg0: i32) -> (i32, i32) {
    %c0_i32 = arith.constant 0 : i32
    %c0_i32_0 = arith.constant 0 : i32
    return %arg0, %c0_i32 : i32, i32
  }
  func.func @transform_1(%arg0: i32) -> (i32, i32) {
    %c0_i32 = arith.constant 0 : i32
    %c0_i32_0 = arith.constant 0 : i32
    %c0_i32_1 = arith.constant 0 : i32
    return %c0_i32, %c0_i32_0 : i32, i32
  }
  func.func @transform_2(%arg0: i32) -> (i32, i32) {
    %c0_i32 = arith.constant 0 : i32
    %c0_i32_0 = arith.constant 0 : i32
    %c0_i32_1 = arith.constant 0 : i32
    return %c0_i32, %c0_i32_0 : i32, i32
  }
  func.func @transform_3(%arg0: i32) -> (i32, i32) {
    %c0_i32 = arith.constant 0 : i32
    %c0_i32_0 = arith.constant 0 : i32
    return %arg0, %c0_i32 : i32, i32
  }
}

</mosaic_0001>

<llo_original>
// kernel: tpu_custom_call.1
$region0: #{tpu_custom_call.1}
  #allocation0 [shape = 'u32[]', space=smem, size = 0x4, offset = 0x4, fixed_abs, tag = 'smem constant byte address 0x4 - core index']
  #allocation1 [shape = 'u32[144,128]{1,0:T(1,128)}', space=vmem, size = 0x12000, scoped, tag = 'internal scratch']
  %s0 = inlined_call_operand.hbm [shape: f32[512,256], index: 0, kind: input, shape index: {}]
  %s1 = inlined_call_operand.hbm [shape: f32[256,128], index: 1, kind: input, shape index: {}]
  %s2 = inlined_call_operand.vmem [shape: f32[1,128], index: 2, kind: input, shape index: {}]
  %s3 = inlined_call_operand.hbm [shape: f32[512,128], index: 3, kind: output, shape index: {}]
  %s4 = sld [smem:[#allocation0]]
  $region53: #{tpu_custom_call.1} parent=0
    _
  %s6 = ssub.s32 1, %s4
  %s7 = scalar_select 0, %s6, %s4
  $region1: #{tpu_custom_call.1} parent=0
    #allocation2 [shape = 'u8[524288]{0}', space=vmem, size = 0x80000, scoped, tag = 'input window, operand 0']
    #allocation3 [shape = 's32[2]{0}', space=sflag, size = 0x8, scoped, tag = 'scoped memory for tpu_custom_call.1']
    #allocation4 [shape = 's32[2]{0}', space=sflag, size = 0x8, scoped, tag = 'scoped memory for tpu_custom_call.1']
    #allocation5 [shape = 'u8[131072]{0}', space=vmem, size = 0x20000, scoped, tag = 'input window, operand 1, single buffered']
    #allocation6 [shape = 's32[1]{0}', space=sflag, size = 0x4, scoped, tag = 'scoped memory for tpu_custom_call.1']
    #allocation7 [shape = 'u8[262144]{0}', space=vmem, size = 0x40000, scoped, tag = 'output window, operand 0']
    %8 = vsyncpa [#allocation3], 0
    %s9 = scalar_lea.sflag [#allocation3], 1
    %10 = vsyncpa %s9, 0
    %11 = vsyncpa [#allocation6], 0
    %12 = vsyncpa [#allocation4], 0
    %s13 = scalar_lea.sflag [#allocation4], 1
    %14 = vsyncpa %s13, 0
    loop: start=0, step=1, limit=4
    $region2: #{tpu_custom_call.1} parent=1 // loop_pre_header
      _
    $region3: #{tpu_custom_call.1} parent=1 // loop_header
      %s16 = sphi 0, %s20
      %p17 = scmp.ge.s32.totalorder %s16, 4
      %s26 = sphi 0, %s28
      %s29 = sphi 0, %s26
      %s30 = sphi 0, %s29
      %s46 = sphi 0, %s30
      %s50 = sphi 0, %s50
      %s52 = sphi 0, %s50
      %s53 = sphi 0, %s52
      %s67 = sphi 0, %s53
      %s71 = sphi 0, %s71
      %s73 = sphi 0, %s71
      %s74 = sphi 0, %s73
      %s88 = sphi 0, %s74
      %s94 = sphi 0, %s96
      %s97 = sphi 0, %s94
      %s98 = sphi 0, %s97
      %s114 = sphi 0, %s98
    $region4: #{tpu_custom_call.1} parent=1 // loop_header_branch
      %19 = sbr.rel (%p17) target = $region8
    $region5: #{tpu_custom_call.1} parent=1 // loop_body
      %s21 = ssub.s32 %s16, 1
      %s22 = ssub.s32 %s16, 2
      %s23 = sadd.s32 %s16, 1
      %s24 = ssub.s32 %s16, %s23
      %p25 = scmp.eq.s32.totalorder %s24, 0
      %s27 = sadd.s32 %s26, 1
      %s28 = scalar_select %p25, %s26, %s27
      %p31 = pneg %p25
      %p32 = scmp.eq.s32.totalorder %s16, 1
      %p33 = por %p31, %p32
      %p34 = scmp.ne.s32.totalorder %s26, %s29
      %p35 = scmp.eq.s32.totalorder %s16, 0
      %p36 = por %p34, %p35
      %p37 = scmp.ne.s32.totalorder %s26, %s29
      %p38 = scmp.eq.s32.totalorder %s21, 1
      %p39 = por %p37, %p38
      %p40 = scmp.ne.s32.totalorder %s29, %s30
      %p41 = scmp.eq.s32.totalorder %s21, 0
      %p42 = por %p40, %p41
      %p43 = scmp.ne.s32.totalorder %s29, %s30
      %p44 = scmp.eq.s32.totalorder %s22, 1
      %p45 = por %p43, %p44
      %p47 = scmp.ne.s32.totalorder %s30, %s46
      %p48 = scmp.eq.s32.totalorder %s22, 0
      %p49 = por %p47, %p48
      %s51 = sadd.s32 %s50, 1
      %p54 = scmp.eq.s32.totalorder %s16, 1
      %p55 = scmp.ne.s32.totalorder %s50, %s52
      %p56 = scmp.eq.s32.totalorder %s16, 0
      %p57 = por %p55, %p56
      %p58 = scmp.ne.s32.totalorder %s50, %s52
      %p59 = scmp.eq.s32.totalorder %s21, 1
      %p60 = por %p58, %p59
      %p61 = scmp.ne.s32.totalorder %s52, %s53
      %p62 = scmp.eq.s32.totalorder %s21, 0
      %p63 = por %p61, %p62
      %p64 = scmp.ne.s32.totalorder %s52, %s53
      %p65 = scmp.eq.s32.totalorder %s22, 1
      %p66 = por %p64, %p65
      %p68 = scmp.ne.s32.totalorder %s53, %s67
      %p69 = scmp.eq.s32.totalorder %s22, 0
      %p70 = por %p68, %p69
      %s72 = sadd.s32 %s71, 1
      %p75 = scmp.eq.s32.totalorder %s16, 1
      %p76 = scmp.ne.s32.totalorder %s71, %s73
      %p77 = scmp.eq.s32.totalorder %s16, 0
      %p78 = por %p76, %p77
      %p79 = scmp.ne.s32.totalorder %s71, %s73
      %p80 = scmp.eq.s32.totalorder %s21, 1
      %p81 = por %p79, %p80
      %p82 = scmp.ne.s32.totalorder %s73, %s74
      %p83 = scmp.eq.s32.totalorder %s21, 0
      %p84 = por %p82, %p83
      %p85 = scmp.ne.s32.totalorder %s73, %s74
      %p86 = scmp.eq.s32.totalorder %s22, 1
      %p87 = por %p85, %p86
      %p89 = scmp.ne.s32.totalorder %s74, %s88
      %p90 = scmp.eq.s32.totalorder %s22, 0
      %p91 = por %p89, %p90
      %s92 = ssub.s32 %s16, %s23
      %p93 = scmp.eq.s32.totalorder %s92, 0
      %s95 = sadd.s32 %s94, 1
      %s96 = scalar_select %p93, %s94, %s95
      %p99 = pneg %p93
      %p100 = scmp.eq.s32.totalorder %s16, 1
      %p101 = por %p99, %p100
      %p102 = scmp.ne.s32.totalorder %s94, %s97
      %p103 = scmp.eq.s32.totalorder %s16, 0
      %p104 = por %p102, %p103
      %p105 = scmp.ne.s32.totalorder %s94, %s97
      %p106 = scmp.eq.s32.totalorder %s21, 1
      %p107 = por %p105, %p106
      %p108 = scmp.ne.s32.totalorder %s97, %s98
      %p109 = scmp.eq.s32.totalorder %s21, 0
      %p110 = por %p108, %p109
      %p111 = scmp.ne.s32.totalorder %s97, %s98
      %p112 = scmp.eq.s32.totalorder %s22, 1
      %p113 = por %p111, %p112
      %p115 = scmp.ne.s32.totalorder %s98, %s114
      %p116 = scmp.eq.s32.totalorder %s22, 0
      %p117 = por %p115, %p116
      %p118 = scmp.le.s32.totalorder 1, %s16
      %p119 = scmp.lt.s32.totalorder %s16, 3
      %p120 = pnand %p118, %p119
      %p121 = pneg %p120
      // Predicated region
      $region9: #{tpu_custom_call.1} parent=5 // pred_check
        _
      $region10: #{tpu_custom_call.1} parent=5 // pred_check_branch
        %123 = sbr.rel (%p120) target = $region12
      $region11: #{tpu_custom_call.1} parent=5 // pred_region
        %s124 = ssub.s32 %s16, 1
        // Predicated region
        $region13: #{tpu_custom_call.1} parent=11 // pred_check
          %p125 = pneg %p63
        $region14: #{tpu_custom_call.1} parent=11 // pred_check_branch
          %127 = sbr.rel (%p125) target = $region16
        $region15: #{tpu_custom_call.1} parent=11 // pred_region
          %s129 = ssub.s32 4096, 4096
          %130 = vsyncadd [#allocation6], %s129
          %s131 = sshll.u32 [#allocation5], 4
          %s132 = int_to_ptr.vmem [resolvable:$true] %s131
          %137 = dma.hbm_to_vmem [thread:$0]  %s1, 4096, %s132, [#allocation6], 128, 128, 8
        $region16: #{tpu_custom_call.1} parent=11 // pred_fallthru
          _
        // Predicated region
        $region17: #{tpu_custom_call.1} parent=11 // pred_check
          %p138 = pneg %p84
        $region18: #{tpu_custom_call.1} parent=11 // pred_check_branch
          %140 = sbr.rel (%p138) target = $region20
        $region19: #{tpu_custom_call.1} parent=11 // pred_region
          _
        $region20: #{tpu_custom_call.1} parent=11 // pred_fallthru
          _
      $region12: #{tpu_custom_call.1} parent=5 // pred_fallthru
        _
      %p141 = scmp.lt.s32.totalorder %s16, 2
      // Predicated region
      $region21: #{tpu_custom_call.1} parent=5 // pred_check
        %p142 = pneg %p141
      $region22: #{tpu_custom_call.1} parent=5 // pred_check_branch
        %144 = sbr.rel (%p142) target = $region24
      $region23: #{tpu_custom_call.1} parent=5 // pred_region
        // Predicated region
        $region25: #{tpu_custom_call.1} parent=23 // pred_check
          %p145 = pneg %p36
        $region26: #{tpu_custom_call.1} parent=23 // pred_check_branch
          %147 = sbr.rel (%p145) target = $region28
        $region27: #{tpu_custom_call.1} parent=23 // pred_region
          %s148 = sand.u32 %s26, 1
          %s149 = scalar_lea.sflag [#allocation3], %s148
          %s150 = sand.u32 %s26, 1
          %s151 = smul.addr %s150, 512
          %s152 = scalar_lea.vmem [#allocation2], %s151
          %s153 = smul.u32 32, %s16
          %s155 = ssub.s32 8192, 8192
          %156 = vsyncadd %s149, %s155
          %s157 = smul.addr %s153, 2
          %s158 = smul.addr %s157, 128
          %s159 = scalar_lea.hbm %s0, %s158
          %s160 = sshll.u32 %s152, 4
          %s161 = int_to_ptr.vmem [resolvable:$true] %s160
          %166 = dma.hbm_to_vmem [thread:$0]  %s159, 8192, %s161, %s149, 256, 256, 16
        $region28: #{tpu_custom_call.1} parent=23 // pred_fallthru
          _
      $region24: #{tpu_custom_call.1} parent=5 // pred_fallthru
        _
      %p167 = scmp.le.s32.totalorder 1, %s16
      %p168 = scmp.lt.s32.totalorder %s16, 3
      %p169 = pnand %p167, %p168
      %p170 = pneg %p169
      // Predicated region
      $region29: #{tpu_custom_call.1} parent=5 // pred_check
        _
      $region30: #{tpu_custom_call.1} parent=5 // pred_check_branch
        %172 = sbr.rel (%p169) target = $region32
      $region31: #{tpu_custom_call.1} parent=5 // pred_region
        %s173 = ssub.s32 %s16, 1
        %s174 = sand.u32 %s29, 1
        %s175 = scalar_lea.sflag [#allocation3], %s174
        %s176 = sand.u32 %s29, 1
        %s177 = smul.addr %s176, 512
        %s178 = scalar_lea.vmem [#allocation2], %s177
        // Predicated region
        $region33: #{tpu_custom_call.1} parent=31 // pred_check
          %p179 = pneg %p42
        $region34: #{tpu_custom_call.1} parent=31 // pred_check_branch
          %181 = sbr.rel (%p179) target = $region36
        $region35: #{tpu_custom_call.1} parent=31 // pred_region
          %182 = dma.done %s175, 8192
        $region36: #{tpu_custom_call.1} parent=31 // pred_fallthru
          _
        // Predicated region
        $region37: #{tpu_custom_call.1} parent=31 // pred_check
          %p183 = pneg %p63
        $region38: #{tpu_custom_call.1} parent=31 // pred_check_branch
          %185 = sbr.rel (%p183) target = $region40
        $region39: #{tpu_custom_call.1} parent=31 // pred_region
          %186 = dma.done [#allocation6], 4096
        $region40: #{tpu_custom_call.1} parent=31 // pred_fallthru
          _
        %s187 = sand.u32 %s29, 1
        %s188 = scalar_lea.sflag [#allocation3], %s187
        %s189 = sand.u32 %s29, 1
        %s190 = smul.addr %s189, 512
        %s191 = scalar_lea.vmem [#allocation2], %s190
        %p192 = pneg %p42
        %p193 = pneg %p39
        %p194 = pneg %p63
        %p195 = pneg %p60
        %p196 = pneg %p84
        %p197 = pneg %p81
        %p198 = pneg %p110
        %p199 = pneg %p107
        %s200 = sand.u32 %s97, 1
        %s201 = scalar_lea.sflag [#allocation4], %s200
        %s202 = sand.u32 %s97, 1
        %s203 = smul.addr %s202, 256
        %s204 = scalar_lea.vmem [#allocation7], %s203
        %s205 = smul.u32 32, %s21
        %s206 = smul.u32 32, %s21
        %v207 = vld [vmem:[%s178] sm:$0xff]
        %v208 = vld [vmem:[%s178 + $0x8] sm:$0xff]
        %v209 = vld [vmem:[%s178 + $0x10] sm:$0xff]
        %v210 = vld [vmem:[%s178 + $0x18] sm:$0xff]
        %v211 = vld [vmem:[%s178 + $0x20] sm:$0xff]
        %v212 = vld [vmem:[%s178 + $0x28] sm:$0xff]
        %v213 = vld [vmem:[%s178 + $0x30] sm:$0xff]
        %v214 = vld [vmem:[%s178 + $0x38] sm:$0xff]
        %v215 = vld [vmem:[%s178 + $0x40] sm:$0xff]
        %v216 = vld [vmem:[%s178 + $0x48] sm:$0xff]
        %v217 = vld [vmem:[%s178 + $0x50] sm:$0xff]
        %v218 = vld [vmem:[%s178 + $0x58] sm:$0xff]
        %v219 = vld [vmem:[%s178 + $0x60] sm:$0xff]
        %v220 = vld [vmem:[%s178 + $0x68] sm:$0xff]
        %v221 = vld [vmem:[%s178 + $0x70] sm:$0xff]
        %v222 = vld [vmem:[%s178 + $0x78] sm:$0xff]
        %v223 = vld [vmem:[%s178 + $0x80] sm:$0xff]
        %v224 = vld [vmem:[%s178 + $0x88] sm:$0xff]
        %v225 = vld [vmem:[%s178 + $0x90] sm:$0xff]
        %v226 = vld [vmem:[%s178 + $0x98] sm:$0xff]
        %v227 = vld [vmem:[%s178 + $0xa0] sm:$0xff]
        %v228 = vld [vmem:[%s178 + $0xa8] sm:$0xff]
        %v229 = vld [vmem:[%s178 + $0xb0] sm:$0xff]
        %v230 = vld [vmem:[%s178 + $0xb8] sm:$0xff]
        %v231 = vld [vmem:[%s178 + $0xc0] sm:$0xff]
        %v232 = vld [vmem:[%s178 + $0xc8] sm:$0xff]
        %v233 = vld [vmem:[%s178 + $0xd0] sm:$0xff]
        %v234 = vld [vmem:[%s178 + $0xd8] sm:$0xff]
        %v235 = vld [vmem:[%s178 + $0xe0] sm:$0xff]
        %v236 = vld [vmem:[%s178 + $0xe8] sm:$0xff]
        %v237 = vld [vmem:[%s178 + $0xf0] sm:$0xff]
        %v238 = vld [vmem:[%s178 + $0xf8] sm:$0xff]
        %v239 = vld [vmem:[%s178 + $0x100] sm:$0xff]
        %v240 = vld [vmem:[%s178 + $0x108] sm:$0xff]
        %v241 = vld [vmem:[%s178 + $0x110] sm:$0xff]
        %v242 = vld [vmem:[%s178 + $0x118] sm:$0xff]
        %v243 = vld [vmem:[%s178 + $0x120] sm:$0xff]
        %v244 = vld [vmem:[%s178 + $0x128] sm:$0xff]
        %v245 = vld [vmem:[%s178 + $0x130] sm:$0xff]
        %v246 = vld [vmem:[%s178 + $0x138] sm:$0xff]
        %v247 = vld [vmem:[%s178 + $0x140] sm:$0xff]
        %v248 = vld [vmem:[%s178 + $0x148] sm:$0xff]
        %v249 = vld [vmem:[%s178 + $0x150] sm:$0xff]
        %v250 = vld [vmem:[%s178 + $0x158] sm:$0xff]
        %v251 = vld [vmem:[%s178 + $0x160] sm:$0xff]
        %v252 = vld [vmem:[%s178 + $0x168] sm:$0xff]
        %v253 = vld [vmem:[%s178 + $0x170] sm:$0xff]
        %v254 = vld [vmem:[%s178 + $0x178] sm:$0xff]
        %v255 = vld [vmem:[%s178 + $0x180] sm:$0xff]
        %v256 = vld [vmem:[%s178 + $0x188] sm:$0xff]
        %v257 = vld [vmem:[%s178 + $0x190] sm:$0xff]
        %v258 = vld [vmem:[%s178 + $0x198] sm:$0xff]
        %v259 = vld [vmem:[%s178 + $0x1a0] sm:$0xff]
        %v260 = vld [vmem:[%s178 + $0x1a8] sm:$0xff]
        %v261 = vld [vmem:[%s178 + $0x1b0] sm:$0xff]
        %v262 = vld [vmem:[%s178 + $0x1b8] sm:$0xff]
        %v263 = vld [vmem:[%s178 + $0x1c0] sm:$0xff]
        %v264 = vld [vmem:[%s178 + $0x1c8] sm:$0xff]
        %v265 = vld [vmem:[%s178 + $0x1d0] sm:$0xff]
        %v266 = vld [vmem:[%s178 + $0x1d8] sm:$0xff]
        %v267 = vld [vmem:[%s178 + $0x1e0] sm:$0xff]
        %v268 = vld [vmem:[%s178 + $0x1e8] sm:$0xff]
        %v269 = vld [vmem:[%s178 + $0x1f0] sm:$0xff]
        %v270 = vld [vmem:[%s178 + $0x1f8] sm:$0xff]
        %v271 = vld [vmem:[#allocation5] sm:$0xff]
        %v272 = vld [vmem:[#allocation5 + $0x8] sm:$0xff]
        %v273 = vld [vmem:[#allocation5 + $0x10] sm:$0xff]
        %v274 = vld [vmem:[#allocation5 + $0x18] sm:$0xff]
        %v275 = vld [vmem:[#allocation5 + $0x20] sm:$0xff]
        %v276 = vld [vmem:[#allocation5 + $0x28] sm:$0xff]
        %v277 = vld [vmem:[#allocation5 + $0x30] sm:$0xff]
        %v278 = vld [vmem:[#allocation5 + $0x38] sm:$0xff]
        %v279 = vld [vmem:[#allocation5 + $0x40] sm:$0xff]
        %v280 = vld [vmem:[#allocation5 + $0x48] sm:$0xff]
        %v281 = vld [vmem:[#allocation5 + $0x50] sm:$0xff]
        %v282 = vld [vmem:[#allocation5 + $0x58] sm:$0xff]
        %v283 = vld [vmem:[#allocation5 + $0x60] sm:$0xff]
        %v284 = vld [vmem:[#allocation5 + $0x68] sm:$0xff]
        %v285 = vld [vmem:[#allocation5 + $0x70] sm:$0xff]
        %v286 = vld [vmem:[#allocation5 + $0x78] sm:$0xff]
        %v287 = vld [vmem:[#allocation5 + $0x80] sm:$0xff]
        %v288 = vld [vmem:[#allocation5 + $0x88] sm:$0xff]
        %v289 = vld [vmem:[#allocation5 + $0x90] sm:$0xff]
        %v290 = vld [vmem:[#allocation5 + $0x98] sm:$0xff]
        %v291 = vld [vmem:[#allocation5 + $0xa0] sm:$0xff]
        %v292 = vld [vmem:[#allocation5 + $0xa8] sm:$0xff]
        %v293 = vld [vmem:[#allocation5 + $0xb0] sm:$0xff]
        %v294 = vld [vmem:[#allocation5 + $0xb8] sm:$0xff]
        %v295 = vld [vmem:[#allocation5 + $0xc0] sm:$0xff]
        %v296 = vld [vmem:[#allocation5 + $0xc8] sm:$0xff]
        %v297 = vld [vmem:[#allocation5 + $0xd0] sm:$0xff]
        %v298 = vld [vmem:[#allocation5 + $0xd8] sm:$0xff]
        %v299 = vld [vmem:[#allocation5 + $0xe0] sm:$0xff]
        %v300 = vld [vmem:[#allocation5 + $0xe8] sm:$0xff]
        %v301 = vld [vmem:[#allocation5 + $0xf0] sm:$0xff]
        %v302 = vld [vmem:[#allocation5 + $0xf8] sm:$0xff]
        %v303 = vld [vmem:[%s2] sm:$0x1]
        %v305 = vlaneseq
        %v306 = vshrl.u32 %v305, 7
        %v307 = vsub.s32 0, %v306
        %v308 = vrot.slane %v303, %v307
        %310 = vmatprep.subr.mxu0 0.0
        %311 = vmatpush1.msra.mxu0 %v271
        %312 = vmatprep.subr.mxu0 0.0
        %313 = vmatpush1.msra.mxu0 %v272
        %314 = vmatprep.subr.mxu0 0.0
        %315 = vmatpush1.msra.mxu0 %v273
        %316 = vmatprep.subr.mxu0 0.0
        %317 = vmatpush1.msra.mxu0 %v274
        %318 = vmatprep.subr.mxu0 0.0
        %319 = vmatpush1.msra.mxu0 %v275
        %320 = vmatprep.subr.mxu0 0.0
        %321 = vmatpush1.msra.mxu0 %v276
        %322 = vmatprep.subr.mxu0 0.0
        %323 = vmatpush1.msra.mxu0 %v277
        %324 = vmatprep.subr.mxu0 0.0
        %325 = vmatpush1.msra.mxu0 %v278
        %326 = vmatprep.subr.mxu0 0.0
        %327 = vmatpush1.msra.mxu0 %v279
        %328 = vmatprep.subr.mxu0 0.0
        %329 = vmatpush1.msra.mxu0 %v280
        %330 = vmatprep.subr.mxu0 0.0
        %331 = vmatpush1.msra.mxu0 %v281
        %332 = vmatprep.subr.mxu0 0.0
        %333 = vmatpush1.msra.mxu0 %v282
        %334 = vmatprep.subr.mxu0 0.0
        %335 = vmatpush1.msra.mxu0 %v283
        %336 = vmatprep.subr.mxu0 0.0
        %337 = vmatpush1.msra.mxu0 %v284
        %338 = vmatprep.subr.mxu0 0.0
        %339 = vmatpush1.msra.mxu0 %v285
        %340 = vmatprep.subr.mxu0 0.0
        %341 = vmatpush1.msra.mxu0 %v286
        %342 = vmatprep.subr.mxu0 0.0
        %343 = vmatpush1.msra.mxu0 %v287
        %344 = vmatprep.subr.mxu0 0.0
        %345 = vmatpush1.msra.mxu0 %v288
        %346 = vmatprep.subr.mxu0 0.0
        %347 = vmatpush1.msra.mxu0 %v289
        %348 = vmatprep.subr.mxu0 0.0
        %349 = vmatpush1.msra.mxu0 %v290
        %350 = vmatprep.subr.mxu0 0.0
        %351 = vmatpush1.msra.mxu0 %v291
        %352 = vmatprep.subr.mxu0 0.0
        %353 = vmatpush1.msra.mxu0 %v292
        %354 = vmatprep.subr.mxu0 0.0
        %355 = vmatpush1.msra.mxu0 %v293
        %356 = vmatprep.subr.mxu0 0.0
        %357 = vmatpush1.msra.mxu0 %v294
        %358 = vmatprep.subr.mxu0 0.0
        %359 = vmatpush1.msra.mxu0 %v295
        %360 = vmatprep.subr.mxu0 0.0
        %361 = vmatpush1.msra.mxu0 %v296
        %362 = vmatprep.subr.mxu0 0.0
        %363 = vmatpush1.msra.mxu0 %v297
        %364 = vmatprep.subr.mxu0 0.0
        %365 = vmatpush1.msra.mxu0 %v298
        %366 = vmatprep.subr.mxu0 0.0
        %367 = vmatpush1.msra.mxu0 %v299
        %368 = vmatprep.subr.mxu0 0.0
        %369 = vmatpush1.msra.mxu0 %v300
        %370 = vmatprep.subr.mxu0 0.0
        %371 = vmatpush1.msra.mxu0 %v301
        %372 = vmatprep.subr.mxu0 0.0
        %373 = vmatpush1.msra.mxu0 %v302
        %374 = vmatprep.mubr.f32.mxu0 %v208
        %375 = vmatmul.mubr.f32.gmra.mrb[0].mxu0 %v207
        %v376 = vpop.f32.mrb[0].mxu0
        %v377 = vadd.f32 %v308, %v376
        %v378 = vpop.f32.mrb[0].mxu0
        %379 = vmatprep.mubr.f32.mxu0 %v210
        %380 = vmatmul.mubr.f32.gmra.mrb[0].mxu0 %v209
        %v381 = vpop.f32.mrb[0].mxu0
        %v382 = vadd.f32 %v308, %v381
        %v383 = vpop.f32.mrb[0].mxu0
        %384 = vmatprep.mubr.f32.mxu0 %v212
        %385 = vmatmul.mubr.f32.gmra.mrb[0].mxu0 %v211
        %v386 = vpop.f32.mrb[0].mxu0
        %v387 = vadd.f32 %v308, %v386
        %v388 = vpop.f32.mrb[0].mxu0
        %389 = vmatprep.mubr.f32.mxu0 %v214
        %390 = vmatmul.mubr.f32.gmra.mrb[0].mxu0 %v213
        %v391 = vpop.f32.mrb[0].mxu0
        %v392 = vadd.f32 %v308, %v391
        %v393 = vpop.f32.mrb[0].mxu0
        %394 = vmatprep.mubr.f32.mxu0 %v216
        %395 = vmatmul.mubr.f32.gmra.mrb[0].mxu0 %v215
        %v396 = vpop.f32.mrb[0].mxu0
        %v397 = vadd.f32 %v308, %v396
        %v398 = vpop.f32.mrb[0].mxu0
        %399 = vmatprep.mubr.f32.mxu0 %v218
        %400 = vmatmul.mubr.f32.gmra.mrb[0].mxu0 %v217
        %v401 = vpop.f32.mrb[0].mxu0
        %v402 = vadd.f32 %v308, %v401
        %v403 = vpop.f32.mrb[0].mxu0
        %404 = vmatprep.mubr.f32.mxu0 %v220
        %405 = vmatmul.mubr.f32.gmra.mrb[0].mxu0 %v219
        %v406 = vpop.f32.mrb[0].mxu0
        %v407 = vadd.f32 %v308, %v406
        %v408 = vpop.f32.mrb[0].mxu0
        %409 = vmatprep.mubr.f32.mxu0 %v222
        %410 = vmatmul.mubr.f32.gmra.mrb[0].mxu0 %v221
        %v411 = vpop.f32.mrb[0].mxu0
        %v412 = vadd.f32 %v308, %v411
        %v413 = vpop.f32.mrb[0].mxu0
        %414 = vmatprep.mubr.f32.mxu0 %v224
        %415 = vmatmul.mubr.f32.gmra.mrb[0].mxu0 %v223
        %v416 = vpop.f32.mrb[0].mxu0
        %v417 = vadd.f32 %v308, %v416
        %v418 = vpop.f32.mrb[0].mxu0
        %419 = vmatprep.mubr.f32.mxu0 %v226
        %420 = vmatmul.mubr.f32.gmra.mrb[0].mxu0 %v225
        %v421 = vpop.f32.mrb[0].mxu0
        %v422 = vadd.f32 %v308, %v421
        %v423 = vpop.f32.mrb[0].mxu0
        %424 = vmatprep.mubr.f32.mxu0 %v228
        %425 = vmatmul.mubr.f32.gmra.mrb[0].mxu0 %v227
        %v426 = vpop.f32.mrb[0].mxu0
        %v427 = vadd.f32 %v308, %v426
        %v428 = vpop.f32.mrb[0].mxu0
        %429 = vmatprep.mubr.f32.mxu0 %v230
        %430 = vmatmul.mubr.f32.gmra.mrb[0].mxu0 %v229
        %v431 = vpop.f32.mrb[0].mxu0
        %v432 = vadd.f32 %v308, %v431
        %v433 = vpop.f32.mrb[0].mxu0
        %434 = vmatprep.mubr.f32.mxu0 %v232
        %435 = vmatmul.mubr.f32.gmra.mrb[0].mxu0 %v231
        %v436 = vpop.f32.mrb[0].mxu0
        %v437 = vadd.f32 %v308, %v436
        %v438 = vpop.f32.mrb[0].mxu0
        %439 = vmatprep.mubr.f32.mxu0 %v234
        %440 = vmatmul.mubr.f32.gmra.mrb[0].mxu0 %v233
        %v441 = vpop.f32.mrb[0].mxu0
        %v442 = vadd.f32 %v308, %v441
        %v443 = vpop.f32.mrb[0].mxu0
        %444 = vmatprep.mubr.f32.mxu0 %v236
        %445 = vmatmul.mubr.f32.gmra.mrb[0].mxu0 %v235
        %v446 = vpop.f32.mrb[0].mxu0
        %v447 = vadd.f32 %v308, %v446
        %v448 = vpop.f32.mrb[0].mxu0
        %449 = vmatprep.mubr.f32.mxu0 %v238
        %450 = vmatmul.mubr.f32.gmra.mrb[0].mxu0 %v237
        %v451 = vpop.f32.mrb[0].mxu0
        %v452 = vadd.f32 %v308, %v451
        %v453 = vpop.f32.mrb[0].mxu0
        %454 = vmatprep.mubr.f32.mxu0 %v240
        %455 = vmatmul.mubr.f32.gmra.mrb[0].mxu0 %v239
        %v456 = vpop.f32.mrb[0].mxu0
        %v457 = vadd.f32 %v308, %v456
        %v458 = vpop.f32.mrb[0].mxu0
        %459 = vmatprep.mubr.f32.mxu0 %v242
        %460 = vmatmul.mubr.f32.gmra.mrb[0].mxu0 %v241
        %v461 = vpop.f32.mrb[0].mxu0
        %v462 = vadd.f32 %v308, %v461
        %v463 = vpop.f32.mrb[0].mxu0
        %464 = vmatprep.mubr.f32.mxu0 %v244
        %465 = vmatmul.mubr.f32.gmra.mrb[0].mxu0 %v243
        %v466 = vpop.f32.mrb[0].mxu0
        %v467 = vadd.f32 %v308, %v466
        %v468 = vpop.f32.mrb[0].mxu0
        %469 = vmatprep.mubr.f32.mxu0 %v246
        %470 = vmatmul.mubr.f32.gmra.mrb[0].mxu0 %v245
        %v471 = vpop.f32.mrb[0].mxu0
        %v472 = vadd.f32 %v308, %v471
        %v473 = vpop.f32.mrb[0].mxu0
        %474 = vmatprep.mubr.f32.mxu0 %v248
        %475 = vmatmul.mubr.f32.gmra.mrb[0].mxu0 %v247
        %v476 = vpop.f32.mrb[0].mxu0
        %v477 = vadd.f32 %v308, %v476
        %v478 = vpop.f32.mrb[0].mxu0
        %479 = vmatprep.mubr.f32.mxu0 %v250
        %480 = vmatmul.mubr.f32.gmra.mrb[0].mxu0 %v249
        %v481 = vpop.f32.mrb[0].mxu0
        %v482 = vadd.f32 %v308, %v481
        %v483 = vpop.f32.mrb[0].mxu0
        %484 = vmatprep.mubr.f32.mxu0 %v252
        %485 = vmatmul.mubr.f32.gmra.mrb[0].mxu0 %v251
        %v486 = vpop.f32.mrb[0].mxu0
        %v487 = vadd.f32 %v308, %v486
        %v488 = vpop.f32.mrb[0].mxu0
        %489 = vmatprep.mubr.f32.mxu0 %v254
        %490 = vmatmul.mubr.f32.gmra.mrb[0].mxu0 %v253
        %v491 = vpop.f32.mrb[0].mxu0
        %v492 = vadd.f32 %v308, %v491
        %v493 = vpop.f32.mrb[0].mxu0
        %494 = vmatprep.mubr.f32.mxu0 %v256
        %495 = vmatmul.mubr.f32.gmra.mrb[0].mxu0 %v255
        %v496 = vpop.f32.mrb[0].mxu0
        %v497 = vadd.f32 %v308, %v496
        %v498 = vpop.f32.mrb[0].mxu0
        %499 = vmatprep.mubr.f32.mxu0 %v258
        %500 = vmatmul.mubr.f32.gmra.mrb[0].mxu0 %v257
        %v501 = vpop.f32.mrb[0].mxu0
        %v502 = vadd.f32 %v308, %v501
        %v503 = vpop.f32.mrb[0].mxu0
        %504 = vmatprep.mubr.f32.mxu0 %v260
        %505 = vmatmul.mubr.f32.gmra.mrb[0].mxu0 %v259
        %v506 = vpop.f32.mrb[0].mxu0
        %v507 = vadd.f32 %v308, %v506
        %v508 = vpop.f32.mrb[0].mxu0
        %509 = vmatprep.mubr.f32.mxu0 %v262
        %510 = vmatmul.mubr.f32.gmra.mrb[0].mxu0 %v261
        %v511 = vpop.f32.mrb[0].mxu0
        %v512 = vadd.f32 %v308, %v511
        %v513 = vpop.f32.mrb[0].mxu0
        %514 = vmatprep.mubr.f32.mxu0 %v264
        %515 = vmatmul.mubr.f32.gmra.mrb[0].mxu0 %v263
        %v516 = vpop.f32.mrb[0].mxu0
        %v517 = vadd.f32 %v308, %v516
        %v518 = vpop.f32.mrb[0].mxu0
        %519 = vmatprep.mubr.f32.mxu0 %v266
        %520 = vmatmul.mubr.f32.gmra.mrb[0].mxu0 %v265
        %v521 = vpop.f32.mrb[0].mxu0
        %v522 = vadd.f32 %v308, %v521
        %v523 = vpop.f32.mrb[0].mxu0
        %524 = vmatprep.mubr.f32.mxu0 %v268
        %525 = vmatmul.mubr.f32.gmra.mrb[0].mxu0 %v267
        %v526 = vpop.f32.mrb[0].mxu0
        %v527 = vadd.f32 %v308, %v526
        %v528 = vpop.f32.mrb[0].mxu0
        %529 = vmatprep.mubr.f32.mxu0 %v270
        %530 = vmatmul.mubr.f32.gmra.mrb[0].mxu0 %v269
        %v531 = vpop.f32.mrb[0].mxu0
        %v532 = vadd.f32 %v308, %v531
        %v533 = vpop.f32.mrb[0].mxu0
        %534 = vdwg.mxu0
        %v535 = vmax.f32 %v377, 0.0
        %v536 = vmax.f32 %v382, 0.0
        %v537 = vmax.f32 %v387, 0.0
        %v538 = vmax.f32 %v392, 0.0
        %v539 = vmax.f32 %v397, 0.0
        %v540 = vmax.f32 %v402, 0.0
        %v541 = vmax.f32 %v407, 0.0
        %v542 = vmax.f32 %v412, 0.0
        %v543 = vmax.f32 %v417, 0.0
        %v544 = vmax.f32 %v422, 0.0
        %v545 = vmax.f32 %v427, 0.0
        %v546 = vmax.f32 %v432, 0.0
        %v547 = vmax.f32 %v437, 0.0
        %v548 = vmax.f32 %v442, 0.0
        %v549 = vmax.f32 %v447, 0.0
        %v550 = vmax.f32 %v452, 0.0
        %v551 = vmax.f32 %v457, 0.0
        %v552 = vmax.f32 %v462, 0.0
        %v553 = vmax.f32 %v467, 0.0
        %v554 = vmax.f32 %v472, 0.0
        %v555 = vmax.f32 %v477, 0.0
        %v556 = vmax.f32 %v482, 0.0
        %v557 = vmax.f32 %v487, 0.0
        %v558 = vmax.f32 %v492, 0.0
        %v559 = vmax.f32 %v497, 0.0
        %v560 = vmax.f32 %v502, 0.0
        %v561 = vmax.f32 %v507, 0.0
        %v562 = vmax.f32 %v512, 0.0
        %v563 = vmax.f32 %v517, 0.0
        %v564 = vmax.f32 %v522, 0.0
        %v565 = vmax.f32 %v527, 0.0
        %v566 = vmax.f32 %v532, 0.0
        %567 = vst [vmem:[%s204] sm:$0xff] %v535
        %568 = vst [vmem:[%s204 + $0x8] sm:$0xff] %v536
        %569 = vst [vmem:[%s204 + $0x10] sm:$0xff] %v537
        %570 = vst [vmem:[%s204 + $0x18] sm:$0xff] %v538
        %571 = vst [vmem:[%s204 + $0x20] sm:$0xff] %v539
        %572 = vst [vmem:[%s204 + $0x28] sm:$0xff] %v540
        %573 = vst [vmem:[%s204 + $0x30] sm:$0xff] %v541
        %574 = vst [vmem:[%s204 + $0x38] sm:$0xff] %v542
        %575 = vst [vmem:[%s204 + $0x40] sm:$0xff] %v543
        %576 = vst [vmem:[%s204 + $0x48] sm:$0xff] %v544
        %577 = vst [vmem:[%s204 + $0x50] sm:$0xff] %v545
        %578 = vst [vmem:[%s204 + $0x58] sm:$0xff] %v546
        %579 = vst [vmem:[%s204 + $0x60] sm:$0xff] %v547
        %580 = vst [vmem:[%s204 + $0x68] sm:$0xff] %v548
        %581 = vst [vmem:[%s204 + $0x70] sm:$0xff] %v549
        %582 = vst [vmem:[%s204 + $0x78] sm:$0xff] %v550
        %583 = vst [vmem:[%s204 + $0x80] sm:$0xff] %v551
        %584 = vst [vmem:[%s204 + $0x88] sm:$0xff] %v552
        %585 = vst [vmem:[%s204 + $0x90] sm:$0xff] %v553
        %586 = vst [vmem:[%s204 + $0x98] sm:$0xff] %v554
        %587 = vst [vmem:[%s204 + $0xa0] sm:$0xff] %v555
        %588 = vst [vmem:[%s204 + $0xa8] sm:$0xff] %v556
        %589 = vst [vmem:[%s204 + $0xb0] sm:$0xff] %v557
        %590 = vst [vmem:[%s204 + $0xb8] sm:$0xff] %v558
        %591 = vst [vmem:[%s204 + $0xc0] sm:$0xff] %v559
        %592 = vst [vmem:[%s204 + $0xc8] sm:$0xff] %v560
        %593 = vst [vmem:[%s204 + $0xd0] sm:$0xff] %v561
        %594 = vst [vmem:[%s204 + $0xd8] sm:$0xff] %v562
        %595 = vst [vmem:[%s204 + $0xe0] sm:$0xff] %v563
        %596 = vst [vmem:[%s204 + $0xe8] sm:$0xff] %v564
        %597 = vst [vmem:[%s204 + $0xf0] sm:$0xff] %v565
        %598 = vst [vmem:[%s204 + $0xf8] sm:$0xff] %v566
        %s599 = sand.u32 %s97, 1
        %s600 = scalar_lea.sflag [#allocation4], %s599
        %s601 = sand.u32 %s97, 1
        %s602 = smul.addr %s601, 256
        %s603 = scalar_lea.vmem [#allocation7], %s602
        // Predicated region
        $region41: #{tpu_custom_call.1} parent=31 // pred_check
          %p604 = pneg %p107
        $region42: #{tpu_custom_call.1} parent=31 // pred_check_branch
          %606 = sbr.rel (%p604) target = $region44
        $region43: #{tpu_custom_call.1} parent=31 // pred_region
          %s607 = smul.u32 32, %s21
          %s609 = ssub.s32 4096, 4096
          %610 = vsyncadd %s600, %s609
          %s611 = smul.addr %s607, 128
          %s612 = scalar_lea.hbm %s3, %s611
          %s613 = sshll.u32 %s603, 4
          %s614 = int_to_ptr.vmem [resolvable:$true] %s613
          %619 = dma.vmem_to_hbm [thread:$0]  %s614, 4096, %s612, %s600, 128, 128, 8
        $region44: #{tpu_custom_call.1} parent=31 // pred_fallthru
          _
      $region32: #{tpu_custom_call.1} parent=5 // pred_fallthru
        _
      %p620 = scmp.le.s32.totalorder 2, %s16
      // Predicated region
      $region45: #{tpu_custom_call.1} parent=5 // pred_check
        %p621 = pneg %p620
      $region46: #{tpu_custom_call.1} parent=5 // pred_check_branch
        %623 = sbr.rel (%p621) target = $region48
      $region47: #{tpu_custom_call.1} parent=5 // pred_region
        %s624 = ssub.s32 %s16, 2
        // Predicated region
        $region49: #{tpu_custom_call.1} parent=47 // pred_check
          %p625 = pneg %p113
        $region50: #{tpu_custom_call.1} parent=47 // pred_check_branch
          %627 = sbr.rel (%p625) target = $region52
        $region51: #{tpu_custom_call.1} parent=47 // pred_region
          %s628 = sand.u32 %s98, 1
          %s629 = scalar_lea.sflag [#allocation4], %s628
          %s630 = sand.u32 %s98, 1
          %s631 = smul.addr %s630, 256
          %s632 = scalar_lea.vmem [#allocation7], %s631
          %633 = dma.done %s629, 4096
        $region52: #{tpu_custom_call.1} parent=47 // pred_fallthru
          _
      $region48: #{tpu_custom_call.1} parent=5 // pred_fallthru
        _
    $region6: #{tpu_custom_call.1} parent=1 // loop_footer
      %s20 = sadd.s32 1, %s16
    $region7: #{tpu_custom_call.1} parent=1 // loop_footer_branch
      %15 = sbr.rel target = $region3
    $region8: #{tpu_custom_call.1} parent=1 // loop_exit
      _
    %634 = vsyncpa [#allocation3], 1
    %s635 = scalar_lea.sflag [#allocation3], 1
    %636 = vsyncpa %s635, 1
    %637 = vsyncpa [#allocation6], 1
    %638 = vsyncpa [#allocation4], 1
    %s639 = scalar_lea.sflag [#allocation4], 1
    %640 = vsyncpa %s639, 1

</llo_original>
